<compile_context>
chip_gen: v7x
topology: tpu7x:2x2x1
jax: 0.10.0
libtpu: 0.0.40
codegen_flags: <defaults>
</compile_context>

<pallas_src>
import math
import functools

import jax
import jax.numpy as jnp
from jax.experimental import pallas as pl
from jax.experimental.pallas import tpu as pltpu


def arc_margin_kernel(flags_ref,                       # SMEM (ni*nj,) int32
                      x_ref, w_ref, b_ref, lab_ref,    # VMEM input tiles
                      out_ref,                         # VMEM (TM,TN) f32
                      acc_ref,                         # VMEM scratch (TM,TN) f32
                      *, s, cos_m, sin_m, th, mm, easy_margin, tn):
    i = pl.program_id(0)
    j = pl.program_id(1)
    k = pl.program_id(2)
    nj = pl.num_programs(1)
    nk = pl.num_programs(2)

    # --- init: accumulator starts at the bias --------------------------------
    @pl.when(k == 0)
    def _():
        acc_ref[...] = jnp.broadcast_to(b_ref[...].astype(jnp.float32),
                                        acc_ref.shape)

    # --- K step: pure MXU work, f32 accumulation ------------------------------
    acc_ref[...] += jnp.dot(x_ref[...], w_ref[...],
                            preferred_element_type=jnp.float32)

    # --- epilogue: once per output tile, after the last K step ----------------
    @pl.when(k == nk - 1)
    def _():
        cosine = acc_ref[...]
        tile_has_label = flags_ref[i * nj + j] != 0

        @pl.when(tile_has_label)
        def _():
            sine = jnp.sqrt(jnp.clip(1.0 - cosine * cosine, 1e-7, 1.0))
            phi = cosine * cos_m - sine * sin_m
            if easy_margin:
                phi = jnp.where(cosine > 0.0, phi, cosine)
            else:
                phi = jnp.where(cosine > th, phi, cosine - mm)
            # global class index of each lane in this N tile
            col = jax.lax.broadcasted_iota(jnp.int32, cosine.shape, 1) + j * tn
            is_target = col == lab_ref[...]
            out_ref[...] = jnp.where(is_target, phi, cosine) * s

        @pl.when(jnp.logical_not(tile_has_label))
        def _():
            out_ref[...] = cosine * s


def arc_margin_forward(x, weight_t, bias, label, *, s=30.0, m=0.1,
                       easy_margin=False, tm=128, tn=512, tk=512,
                       compute_dtype=jnp.bfloat16):
    """x: (B, D), weight_t: (D, N) (nn.Linear weight, transposed),
    bias: (N,), label: (B,) int. Returns (output (B,N) f32, label)."""
    B, D = x.shape
    N = weight_t.shape[1]

    tm = min(tm, B)
    tn = min(tn, N)
    tk = min(tk, D)
    assert B % tm == 0 and N % tn == 0 and D % tk == 0, (
        "B, N, D must be divisible by the tile sizes (pad inputs if needed)")
    ni, nj, nk = B // tm, N // tn, D // tk

    cos_m = math.cos(m)
    sin_m = math.sin(m)
    th = math.cos(math.pi - m)
    mm = math.sin(math.pi - m) * m

    x_c = x.astype(compute_dtype)
    w_c = weight_t.astype(compute_dtype)
    bias2d = bias.reshape(1, N).astype(jnp.float32)
    lab2d = label.reshape(B, 1).astype(jnp.int32)

    # Per-(row_tile, col_tile) flag: does any label of this row tile land in
    # this column tile?  (Flat 1-D int32 so the SMEM footprint stays tiny.)
    lab_tile = (label.astype(jnp.int32) // tn).reshape(ni, tm)          # (ni, tm)
    flags = (lab_tile[:, :, None] ==
             jnp.arange(nj, dtype=jnp.int32)[None, None, :]).any(axis=1)
    flags = flags.reshape(ni * nj).astype(jnp.int32)

    kernel = functools.partial(
        arc_margin_kernel, s=float(s), cos_m=cos_m, sin_m=sin_m,
        th=th, mm=mm, easy_margin=easy_margin, tn=tn)

    # VMEM budget: double-buffered bf16 x/W tiles + double-buffered f32 output
    # tile + f32 accumulator + small bias / label blocks.
    isz = jnp.dtype(compute_dtype).itemsize
    est = (2 * (tm * tk + tk * tn) * isz
           + 2 * tm * tn * 4 + tm * tn * 4
           + 2 * (tn * 4 + tm * 4))
    vmem_limit = int(min(max(2 * est, 16 * 1024 * 1024), 64 * 1024 * 1024))

    grid_spec = pltpu.PrefetchScalarGridSpec(
        num_scalar_prefetch=1,
        grid=(ni, nj, nk),
        in_specs=[
            pl.BlockSpec((tm, tk), lambda i, j, k, fl: (i, k)),   # x
            pl.BlockSpec((tk, tn), lambda i, j, k, fl: (k, j)),   # W (D,N)
            pl.BlockSpec((1, tn), lambda i, j, k, fl: (0, j)),    # bias
            pl.BlockSpec((tm, 1), lambda i, j, k, fl: (i, 0)),    # label
        ],
        out_specs=pl.BlockSpec((tm, tn), lambda i, j, k, fl: (i, j)),
        scratch_shapes=[pltpu.VMEM((tm, tn), jnp.float32)],
    )

    out = pl.pallas_call(
        kernel,
        out_shape=jax.ShapeDtypeStruct((B, N), jnp.float32),
        grid_spec=grid_spec,
        compiler_params=pltpu.CompilerParams(
            dimension_semantics=("parallel", "parallel", "arbitrary"),
            vmem_limit_bytes=vmem_limit),
    )(flags, x_c, w_c, bias2d, lab2d)

    # Module returns (output, label)
    return out, label


def reference_forward(x, weight_t, bias, label, *, s=30.0, m=0.1,
                      easy_margin=False, compute_dtype=jnp.bfloat16):
    # Same bf16-operand / f32-accumulate matmul as the kernel, rest in f32.
    cosine = jnp.dot(x.astype(compute_dtype), weight_t.astype(compute_dtype),
                     preferred_element_type=jnp.float32)
    cosine = cosine + bias.astype(jnp.float32)[None, :]
    sine = jnp.sqrt(jnp.clip(1.0 - cosine ** 2, 1e-7, 1.0))
    cos_m, sin_m = math.cos(m), math.sin(m)
    th, mm = math.cos(math.pi - m), math.sin(math.pi - m) * m
    phi = cosine * cos_m - sine * sin_m
    if easy_margin:
        phi = jnp.where(cosine > 0, phi, cosine)
    else:
        phi = jnp.where(cosine > th, phi, cosine - mm)
    one_hot = jax.nn.one_hot(label, cosine.shape[1], dtype=jnp.float32)
    out = (one_hot * phi + (1.0 - one_hot) * cosine) * s
    return out, label


if __name__ == "__main__":
    # Small shapes that still exercise every grid axis: grid = (2, 4, 2).
    B, D, N = 16, 256, 1024          # batch, in_features, out_features
    TM, TN, TK = 8, 256, 128

    key = jax.random.PRNGKey(0)
    kx, kw, kb, kl = jax.random.split(key, 4)

    x = jax.random.normal(kx, (B, D), dtype=jnp.float32)
    # nn.Linear(D, N): weight (N, D), bias (N,); store weight transposed (D, N).
    bound = 1.0 / math.sqrt(D)
    weight = jax.random.uniform(kw, (N, D), minval=-bound, maxval=bound,
                                dtype=jnp.float32)
    bias = jax.random.uniform(kb, (N,), minval=-bound, maxval=bound,
                              dtype=jnp.float32)
    weight_t = weight.T
    label = jax.random.randint(kl, (B,), 0, N, dtype=jnp.int32)

    out, lab = arc_margin_forward(x, weight_t, bias, label, s=30.0, m=0.1,
                                  easy_margin=False, tm=TM, tn=TN, tk=TK)
    out = jax.block_until_ready(out)

    ref, _ = reference_forward(x, weight_t, bias, label, s=30.0, m=0.1,
                               easy_margin=False)

    assert out.shape == (B, N) and out.dtype == jnp.float32
    max_err = float(jnp.max(jnp.abs(out - ref)))
    assert jnp.allclose(out, ref, atol=2e-3, rtol=2e-3), (
        f"mismatch vs reference, max abs err = {max_err}")
    assert jnp.array_equal(lab, label)

    print("KERNEL_OK")
</pallas_src>

<mosaic_0001>
module attributes {stable_mosaic.version = 11 : i64} {
  func.func @arc_margin_kernel(%arg0: i32, %arg1: i32, %arg2: i32, %arg3: memref<8xi32, #tpu.memory_space<smem>>, %arg4: memref<8x128xbf16, #tpu.memory_space<vmem>>, %arg5: memref<128x256xbf16, #tpu.memory_space<vmem>>, %arg6: memref<1x256xf32, #tpu.memory_space<vmem>>, %arg7: memref<8x1xi32, #tpu.memory_space<vmem>>, %arg8: memref<8x256xf32, #tpu.memory_space<vmem>>, %arg9: memref<8x256xf32, #tpu.memory_space<vmem>>) attributes {dimension_semantics = [#tpu.dimension_semantics<parallel>, #tpu.dimension_semantics<parallel>, #tpu.dimension_semantics<arbitrary>], iteration_bounds = array<i64: 2, 4, 2>, scalar_prefetch = 1 : i64, scratch_operands = 1 : i64, tpu.core_type = #tpu.core_type<tc>, window_params = [{transform_indices = @transform_0, window_bounds = array<i64: 8, 128>}, {transform_indices = @transform_1, window_bounds = array<i64: 128, 256>}, {transform_indices = @transform_2, window_bounds = array<i64: 1, 256>}, {transform_indices = @transform_3, window_bounds = array<i64: 8, 1>}, {transform_indices = @transform_4, window_bounds = array<i64: 8, 256>}]} {
    %c0_i32 = arith.constant 0 : i32
    %0 = arith.cmpi eq, %arg2, %c0_i32 : i32
    %1 = arith.extui %0 : i1 to i32
    %c0_i32_0 = arith.constant 0 : i32
    %2 = arith.cmpi ne, %1, %c0_i32_0 : i32
    scf.if %2 {
      %c0_9 = arith.constant 0 : index
      %c0_10 = arith.constant 0 : index
      %12 = vector.load %arg6[%c0_9, %c0_10] : memref<1x256xf32, #tpu.memory_space<vmem>>, vector<1x256xf32>
      %13 = vector.shape_cast %12 : vector<1x256xf32> to vector<1x256xf32>
      %14 = vector.broadcast %13 : vector<1x256xf32> to vector<8x256xf32>
      %c0_11 = arith.constant 0 : index
      %c0_12 = arith.constant 0 : index
      %15 = vector.load %arg9[%c0_11, %c0_12] : memref<8x256xf32, #tpu.memory_space<vmem>>, vector<8x256xf32>
      tpu.vector_store %arg9[%c0_11, %c0_12], %14 {strides = array<i32>} : memref<8x256xf32, #tpu.memory_space<vmem>>, vector<8x256xf32>,
    } else {
    }
    %c0 = arith.constant 0 : index
    %c0_1 = arith.constant 0 : index
    %3 = vector.load %arg9[%c0, %c0_1] : memref<8x256xf32, #tpu.memory_space<vmem>>, vector<8x256xf32>
    %c0_2 = arith.constant 0 : index
    %c0_3 = arith.constant 0 : index
    %4 = vector.load %arg4[%c0_2, %c0_3] : memref<8x128xbf16, #tpu.memory_space<vmem>>, vector<8x128xbf16>
    %c0_4 = arith.constant 0 : index
    %c0_5 = arith.constant 0 : index
    %5 = vector.load %arg5[%c0_4, %c0_5] : memref<128x256xbf16, #tpu.memory_space<vmem>>, vector<128x256xbf16>
    %cst = arith.constant dense<0.000000e+00> : vector<8x256xf32>
    %6 = tpu.matmul %4, %5, %cst {dimension_numbers = #tpu.dot_dimension_numbers<[1], [0], [0], [1], [0, 0, 1, 1], [], []>} : vector<8x128xbf16>, vector<128x256xbf16>, vector<8x256xf32> -> vector<8x256xf32>
    %7 = arith.addf %3, %6 : vector<8x256xf32>
    %c0_6 = arith.constant 0 : index
    %c0_7 = arith.constant 0 : index
    %8 = vector.load %arg9[%c0_6, %c0_7] : memref<8x256xf32, #tpu.memory_space<vmem>>, vector<8x256xf32>
    tpu.vector_store %arg9[%c0_6, %c0_7], %7 {strides = array<i32>} : memref<8x256xf32, #tpu.memory_space<vmem>>, vector<8x256xf32>,
    %c1_i32 = arith.constant 1 : i32
    %9 = arith.cmpi eq, %arg2, %c1_i32 : i32
    %10 = arith.extui %9 : i1 to i32
    %c0_i32_8 = arith.constant 0 : i32
    %11 = arith.cmpi ne, %10, %c0_i32_8 : i32
    scf.if %11 {
      %c0_9 = arith.constant 0 : index
      %c0_10 = arith.constant 0 : index
      %12 = vector.load %arg9[%c0_9, %c0_10] : memref<8x256xf32, #tpu.memory_space<vmem>>, vector<8x256xf32>
      %c4_i32 = arith.constant 4 : i32
      %13 = arith.muli %arg0, %c4_i32 : i32
      %14 = arith.addi %13, %arg1 : i32
      %15 = arith.index_cast %14 : i32 to index
      %16 = memref.load %arg3[%15] : memref<8xi32, #tpu.memory_space<smem>>
      %c0_i32_11 = arith.constant 0 : i32
      %17 = arith.cmpi ne, %16, %c0_i32_11 : i32
      %18 = arith.extui %17 : i1 to i32
      %c0_i32_12 = arith.constant 0 : i32
      %19 = arith.cmpi ne, %18, %c0_i32_12 : i32
      scf.if %19 {
        %23 = arith.mulf %12, %12 : vector<8x256xf32>
        %cst_14 = arith.constant 1.000000e+00 : f32
        %24 = vector.broadcast %cst_14 : f32 to vector<8x256xf32>
        %25 = arith.subf %24, %23 : vector<8x256xf32>
        %cst_15 = arith.constant 1.000000e-07 : f32
        %cst_16 = arith.constant 1.000000e+00 : f32
        %26 = vector.broadcast %cst_15 : f32 to vector<8x256xf32>
        %27 = arith.maximumf %26, %25 : vector<8x256xf32>
        %28 = vector.broadcast %cst_16 : f32 to vector<8x256xf32>
        %29 = arith.minimumf %28, %27 : vector<8x256xf32>
        %30 = math.sqrt %29 : vector<8x256xf32>
        %cst_17 = arith.constant 0.995004177 : f32
        %31 = vector.broadcast %cst_17 : f32 to vector<8x256xf32>
        %32 = arith.mulf %12, %31 : vector<8x256xf32>
        %cst_18 = arith.constant 0.0998334139 : f32
        %33 = vector.broadcast %cst_18 : f32 to vector<8x256xf32>
        %34 = arith.mulf %30, %33 : vector<8x256xf32>
        %35 = arith.subf %32, %34 : vector<8x256xf32>
        %cst_19 = arith.constant -0.995004177 : f32
        %36 = vector.broadcast %cst_19 : f32 to vector<8x256xf32>
        %37 = arith.cmpf ogt, %12, %36 : vector<8x256xf32>
        %cst_20 = arith.constant 0.0099833412 : f32
        %38 = vector.broadcast %cst_20 : f32 to vector<8x256xf32>
        %39 = arith.subf %12, %38 : vector<8x256xf32>
        %40 = arith.select %37, %35, %39 : vector<8x256xi1>, vector<8x256xf32>
        %41 = tpu.iota {dimensions = array<i32: 1>} : vector<8x256xi32>
        %c256_i32 = arith.constant 256 : i32
        %42 = arith.muli %arg1, %c256_i32 : i32
        %43 = vector.broadcast %42 : i32 to vector<8x256xi32>
        %44 = arith.addi %41, %43 : vector<8x256xi32>
        %c0_21 = arith.constant 0 : index
        %c0_22 = arith.constant 0 : index
        %45 = vector.load %arg7[%c0_21, %c0_22] : memref<8x1xi32, #tpu.memory_space<vmem>>, vector<8x1xi32>
        %46 = vector.broadcast %45 : vector<8x1xi32> to vector<8x256xi32>
        %47 = arith.cmpi eq, %44, %46 : vector<8x256xi32>
        %48 = arith.select %47, %40, %12 : vector<8x256xi1>, vector<8x256xf32>
        %cst_23 = arith.constant 3.000000e+01 : f32
        %49 = vector.broadcast %cst_23 : f32 to vector<8x256xf32>
        %50 = arith.mulf %48, %49 : vector<8x256xf32>
        %c0_24 = arith.constant 0 : index
        %c0_25 = arith.constant 0 : index
        %51 = vector.load %arg8[%c0_24, %c0_25] : memref<8x256xf32, #tpu.memory_space<vmem>>, vector<8x256xf32>
        tpu.vector_store %arg8[%c0_24, %c0_25], %50 {strides = array<i32>} : memref<8x256xf32, #tpu.memory_space<vmem>>, vector<8x256xf32>,
      } else {
      }
      %true = arith.constant true
      %20 = arith.xori %17, %true : i1
      %21 = arith.extui %20 : i1 to i32
      %c0_i32_13 = arith.constant 0 : i32
      %22 = arith.cmpi ne, %21, %c0_i32_13 : i32
      scf.if %22 {
        %cst_14 = arith.constant 3.000000e+01 : f32
        %23 = vector.broadcast %cst_14 : f32 to vector<8x256xf32>
        %24 = arith.mulf %12, %23 : vector<8x256xf32>
        %c0_15 = arith.constant 0 : index
        %c0_16 = arith.constant 0 : index
        %25 = vector.load %arg8[%c0_15, %c0_16] : memref<8x256xf32, #tpu.memory_space<vmem>>, vector<8x256xf32>
        tpu.vector_store %arg8[%c0_15, %c0_16], %24 {strides = array<i32>} : memref<8x256xf32, #tpu.memory_space<vmem>>, vector<8x256xf32>,
      } else {
      }
    } else {
    }
    return
  }
  func.func @transform_0(%arg0: i32, %arg1: i32, %arg2: i32, %arg3: memref<8xi32, #tpu.memory_space<smem>>) -> (i32, i32) {
    %c0_i32 = arith.constant 0 : i32
    return %arg0, %arg2 : i32, i32
  }
  func.func @transform_1(%arg0: i32, %arg1: i32, %arg2: i32, %arg3: memref<8xi32, #tpu.memory_space<smem>>) -> (i32, i32) {
    %c0_i32 = arith.constant 0 : i32
    return %arg2, %arg1 : i32, i32
  }
  func.func @transform_2(%arg0: i32, %arg1: i32, %arg2: i32, %arg3: memref<8xi32, #tpu.memory_space<smem>>) -> (i32, i32) {
    %c0_i32 = arith.constant 0 : i32
    %c0_i32_0 = arith.constant 0 : i32
    return %c0_i32, %arg1 : i32, i32
  }
  func.func @transform_3(%arg0: i32, %arg1: i32, %arg2: i32, %arg3: memref<8xi32, #tpu.memory_space<smem>>) -> (i32, i32) {
    %c0_i32 = arith.constant 0 : i32
    %c0_i32_0 = arith.constant 0 : i32
    return %arg0, %c0_i32 : i32, i32
  }
  func.func @transform_4(%arg0: i32, %arg1: i32, %arg2: i32, %arg3: memref<8xi32, #tpu.memory_space<smem>>) -> (i32, i32) {
    %c0_i32 = arith.constant 0 : i32
    return %arg0, %arg1 : i32, i32
  }
}

</mosaic_0001>

<llo_original>
// kernel: tpu_custom_call.1
$region0: #{tpu_custom_call.1}
  #allocation0 [shape = 'u32[]', space=smem, size = 0x4, offset = 0x4, fixed_abs, tag = 'smem constant byte address 0x4 - core index']
  #allocation1 [shape = 'u32[144,128]{1,0:T(1,128)}', space=vmem, size = 0x12000, scoped, tag = 'internal scratch']
  #allocation2 [shape = 'f32[8,256]{1,0:T(8,128)}', space=vmem, size = 0x2000, scoped, tag = 'scratch operand']
  #allocation3 [shape = 's32[1]{0}', space=sflag, size = 0x4, scoped, tag = 'scoped memory for tpu_custom_call.1']
  #allocation4 [shape = 'u8[512]{0}', space=smem, size = 0x200, scoped, tag = 'prefetched SMEM operand 0']
  %s0 = inlined_call_operand.hbm [shape: s32[8], index: 0, kind: input, shape index: {}]
  %s1 = inlined_call_operand.vmem [shape: bf16[16,256], index: 1, kind: input, shape index: {}]
  %s2 = inlined_call_operand.hbm [shape: bf16[256,1024], index: 2, kind: input, shape index: {}]
  %s3 = inlined_call_operand.vmem [shape: f32[1,1024], index: 3, kind: input, shape index: {}]
  %s4 = inlined_call_operand.vmem [shape: s32[16,1], index: 4, kind: input, shape index: {}]
  %s5 = inlined_call_operand.hbm [shape: f32[16,1024], index: 5, kind: output, shape index: {}]
  %s6 = sld [smem:[#allocation0]]
  $region69: #{tpu_custom_call.1} parent=0
    _
  %s8 = ssub.s32 1, %s6
  %s9 = scalar_select 0, %s8, %s6
  %11 = dma.hbm_to_smem %s0, 16, [#allocation4], [#allocation3]
  %12 = dma.done [#allocation3], 16
  %13 = sfence
  $region1: #{tpu_custom_call.1} parent=0
    #allocation5 [shape = 'u8[131072]{0}', space=vmem, size = 0x20000, scoped, tag = 'input window, operand 2']
    #allocation6 [shape = 's32[2]{0}', space=sflag, size = 0x8, scoped, tag = 'scoped memory for tpu_custom_call.1']
    #allocation7 [shape = 's32[2]{0}', space=sflag, size = 0x8, scoped, tag = 'scoped memory for tpu_custom_call.1']
    #allocation8 [shape = 'u8[16384]{0}', space=vmem, size = 0x4000, scoped, tag = 'output window, operand 0']
    %14 = vsyncpa [#allocation6], 0
    %s15 = scalar_lea.sflag [#allocation6], 1
    %16 = vsyncpa %s15, 0
    %17 = vsyncpa [#allocation7], 0
    %s18 = scalar_lea.sflag [#allocation7], 1
    %19 = vsyncpa %s18, 0
    loop: start=0, step=1, limit=18
    $region2: #{tpu_custom_call.1} parent=1 // loop_pre_header
      _
    $region3: #{tpu_custom_call.1} parent=1 // loop_header
      %s21 = sphi 0, %s25
      %p22 = scmp.ge.s32.totalorder %s21, 18
      %s28 = sphi 0, %s47
      %s29 = sphi 0, %s43
      %s30 = sphi 0, %s39
      %s31 = sphi 0, %s28
      %s32 = sphi 0, %s29
      %s33 = sphi 0, %s30
      %s34 = sphi 0, %s31
      %s35 = sphi 0, %s32
      %s36 = sphi 0, %s33
      %s52 = sphi 0, %s54
      %s55 = sphi 0, %s52
      %s56 = sphi 0, %s55
      %s72 = sphi 0, %s56
      %s80 = sphi 0, %s82
      %s83 = sphi 0, %s80
      %s84 = sphi 0, %s83
      %s100 = sphi 0, %s84
      %s106 = sphi 0, %s108
      %s109 = sphi 0, %s106
      %s110 = sphi 0, %s109
      %s126 = sphi 0, %s110
      %s132 = sphi 0, %s134
      %s135 = sphi 0, %s132
      %s136 = sphi 0, %s135
      %s152 = sphi 0, %s136
      %s160 = sphi 0, %s162
      %s163 = sphi 0, %s160
      %s164 = sphi 0, %s163
      %s180 = sphi 0, %s164
    $region4: #{tpu_custom_call.1} parent=1 // loop_header_branch
      %24 = sbr.rel (%p22) target = $region8
    $region5: #{tpu_custom_call.1} parent=1 // loop_body
      %s26 = ssub.s32 %s21, 1
      %s27 = ssub.s32 %s21, 2
      %s37 = sadd.s32 1, %s30
      %p38 = scmp.ge.s32.totalorder %s37, 2
      %s39 = scalar_select %p38, 0, %s37
      %s40 = sadd.s32 1, %s29
      %s41 = scalar_select %p38, %s40, %s29
      %p42 = scmp.ge.s32.totalorder %s41, 4
      %s43 = scalar_select %p42, 0, %s41
      %s44 = sadd.s32 1, %s28
      %s45 = scalar_select %p42, %s44, %s28
      %p46 = scmp.ge.s32.totalorder %s45, 2
      %s47 = scalar_select %p46, 0, %s45
      %s48 = ssub.s32 %s28, %s47
      %s49 = ssub.s32 %s30, %s39
      %s50 = sor.u32 %s48, %s49
      %p51 = scmp.eq.s32.totalorder %s50, 0
      %s53 = sadd.s32 %s52, 1
      %s54 = scalar_select %p51, %s52, %s53
      %p57 = pneg %p51
      %p58 = scmp.eq.s32.totalorder %s21, 15
      %p59 = por %p57, %p58
      %p60 = scmp.ne.s32.totalorder %s52, %s55
      %p61 = scmp.eq.s32.totalorder %s21, 0
      %p62 = por %p60, %p61
      %p63 = scmp.ne.s32.totalorder %s52, %s55
      %p64 = scmp.eq.s32.totalorder %s26, 15
      %p65 = por %p63, %p64
      %p66 = scmp.ne.s32.totalorder %s55, %s56
      %p67 = scmp.eq.s32.totalorder %s26, 0
      %p68 = por %p66, %p67
      %p69 = scmp.ne.s32.totalorder %s55, %s56
      %p70 = scmp.eq.s32.totalorder %s27, 15
      %p71 = por %p69, %p70
      %p73 = scmp.ne.s32.totalorder %s56, %s72
      %p74 = scmp.eq.s32.totalorder %s27, 0
      %p75 = por %p73, %p74
      %s76 = ssub.s32 %s30, %s39
      %s77 = ssub.s32 %s29, %s43
      %s78 = sor.u32 %s76, %s77
      %p79 = scmp.eq.s32.totalorder %s78, 0
      %s81 = sadd.s32 %s80, 1
      %s82 = scalar_select %p79, %s80, %s81
      %p85 = pneg %p79
      %p86 = scmp.eq.s32.totalorder %s21, 15
      %p87 = por %p85, %p86
      %p88 = scmp.ne.s32.totalorder %s80, %s83
      %p89 = scmp.eq.s32.totalorder %s21, 0
      %p90 = por %p88, %p89
      %p91 = scmp.ne.s32.totalorder %s80, %s83
      %p92 = scmp.eq.s32.totalorder %s26, 15
      %p93 = por %p91, %p92
      %p94 = scmp.ne.s32.totalorder %s83, %s84
      %p95 = scmp.eq.s32.totalorder %s26, 0
      %p96 = por %p94, %p95
      %p97 = scmp.ne.s32.totalorder %s83, %s84
      %p98 = scmp.eq.s32.totalorder %s27, 15
      %p99 = por %p97, %p98
      %p101 = scmp.ne.s32.totalorder %s84, %s100
      %p102 = scmp.eq.s32.totalorder %s27, 0
      %p103 = por %p101, %p102
      %s104 = ssub.s32 %s29, %s43
      %p105 = scmp.eq.s32.totalorder %s104, 0
      %s107 = sadd.s32 %s106, 1
      %s108 = scalar_select %p105, %s106, %s107
      %p111 = pneg %p105
      %p112 = scmp.eq.s32.totalorder %s21, 15
      %p113 = por %p111, %p112
      %p114 = scmp.ne.s32.totalorder %s106, %s109
      %p115 = scmp.eq.s32.totalorder %s21, 0
      %p116 = por %p114, %p115
      %p117 = scmp.ne.s32.totalorder %s106, %s109
      %p118 = scmp.eq.s32.totalorder %s26, 15
      %p119 = por %p117, %p118
      %p120 = scmp.ne.s32.totalorder %s109, %s110
      %p121 = scmp.eq.s32.totalorder %s26, 0
      %p122 = por %p120, %p121
      %p123 = scmp.ne.s32.totalorder %s109, %s110
      %p124 = scmp.eq.s32.totalorder %s27, 15
      %p125 = por %p123, %p124
      %p127 = scmp.ne.s32.totalorder %s110, %s126
      %p128 = scmp.eq.s32.totalorder %s27, 0
      %p129 = por %p127, %p128
      %s130 = ssub.s32 %s28, %s47
      %p131 = scmp.eq.s32.totalorder %s130, 0
      %s133 = sadd.s32 %s132, 1
      %s134 = scalar_select %p131, %s132, %s133
      %p137 = pneg %p131
      %p138 = scmp.eq.s32.totalorder %s21, 15
      %p139 = por %p137, %p138
      %p140 = scmp.ne.s32.totalorder %s132, %s135
      %p141 = scmp.eq.s32.totalorder %s21, 0
      %p142 = por %p140, %p141
      %p143 = scmp.ne.s32.totalorder %s132, %s135
      %p144 = scmp.eq.s32.totalorder %s26, 15
      %p145 = por %p143, %p144
      %p146 = scmp.ne.s32.totalorder %s135, %s136
      %p147 = scmp.eq.s32.totalorder %s26, 0
      %p148 = por %p146, %p147
      %p149 = scmp.ne.s32.totalorder %s135, %s136
      %p150 = scmp.eq.s32.totalorder %s27, 15
      %p151 = por %p149, %p150
      %p153 = scmp.ne.s32.totalorder %s136, %s152
      %p154 = scmp.eq.s32.totalorder %s27, 0
      %p155 = por %p153, %p154
      %s156 = ssub.s32 %s28, %s47
      %s157 = ssub.s32 %s29, %s43
      %s158 = sor.u32 %s156, %s157
      %p159 = scmp.eq.s32.totalorder %s158, 0
      %s161 = sadd.s32 %s160, 1
      %s162 = scalar_select %p159, %s160, %s161
      %p165 = pneg %p159
      %p166 = scmp.eq.s32.totalorder %s21, 15
      %p167 = por %p165, %p166
      %p168 = scmp.ne.s32.totalorder %s160, %s163
      %p169 = scmp.eq.s32.totalorder %s21, 0
      %p170 = por %p168, %p169
      %p171 = scmp.ne.s32.totalorder %s160, %s163
      %p172 = scmp.eq.s32.totalorder %s26, 15
      %p173 = por %p171, %p172
      %p174 = scmp.ne.s32.totalorder %s163, %s164
      %p175 = scmp.eq.s32.totalorder %s26, 0
      %p176 = por %p174, %p175
      %p177 = scmp.ne.s32.totalorder %s163, %s164
      %p178 = scmp.eq.s32.totalorder %s27, 15
      %p179 = por %p177, %p178
      %p181 = scmp.ne.s32.totalorder %s164, %s180
      %p182 = scmp.eq.s32.totalorder %s27, 0
      %p183 = por %p181, %p182
      %p184 = scmp.le.s32.totalorder 1, %s21
      %p185 = scmp.lt.s32.totalorder %s21, 17
      %p186 = pnand %p184, %p185
      %p187 = pneg %p186
      // Predicated region
      $region9: #{tpu_custom_call.1} parent=5 // pred_check
        _
      $region10: #{tpu_custom_call.1} parent=5 // pred_check_branch
        %189 = sbr.rel (%p186) target = $region12
      $region11: #{tpu_custom_call.1} parent=5 // pred_region
        %s190 = ssub.s32 %s21, 1
      $region12: #{tpu_custom_call.1} parent=5 // pred_fallthru
        _
      %p191 = scmp.lt.s32.totalorder %s21, 16
      // Predicated region
      $region13: #{tpu_custom_call.1} parent=5 // pred_check
        %p192 = pneg %p191
      $region14: #{tpu_custom_call.1} parent=5 // pred_check_branch
        %194 = sbr.rel (%p192) target = $region16
      $region15: #{tpu_custom_call.1} parent=5 // pred_region
        // Predicated region
        $region17: #{tpu_custom_call.1} parent=15 // pred_check
          %p195 = pneg %p62
        $region18: #{tpu_custom_call.1} parent=15 // pred_check_branch
          %197 = sbr.rel (%p195) target = $region20
        $region19: #{tpu_custom_call.1} parent=15 // pred_region
          %p198 = scmp.lt.s32.totalorder %s28, 1
          %s199 = scalar_select %p198, %s28, 1
          %p200 = scmp.lt.s32.totalorder %s30, 1
          %s201 = scalar_select %p200, %s30, 1
          %s202 = smul.addr %s199, 2
          %s203 = sadd.s32 %s201, %s202
          %s204 = smul.addr %s203, 4
          %s205 = scalar_lea.vmem %s1, %s204
        $region20: #{tpu_custom_call.1} parent=15 // pred_fallthru
          _
        // Predicated region
        $region21: #{tpu_custom_call.1} parent=15 // pred_check
          %p206 = pneg %p90
        $region22: #{tpu_custom_call.1} parent=15 // pred_check_branch
          %208 = sbr.rel (%p206) target = $region24
        $region23: #{tpu_custom_call.1} parent=15 // pred_region
          %s209 = sand.u32 %s80, 1
          %s210 = scalar_lea.sflag [#allocation6], %s209
          %s211 = sand.u32 %s80, 1
          %s212 = smul.addr %s211, 128
          %s213 = scalar_lea.vmem [#allocation5], %s212
          %s214 = smul.u32 16, %s30
          %s215 = smul.u32 2, %s29
          %s217 = ssub.s32 2048, 2048
          %218 = vsyncadd %s210, %s217
          %s219 = smul.addr %s214, 8
          %s220 = sadd.s32 %s215, %s219
          %s221 = smul.addr %s220, 64
          %s222 = scalar_lea.hbm %s2, %s221
          %s223 = sshll.u32 %s213, 4
          %s224 = int_to_ptr.vmem [resolvable:$true] %s223
          %229 = dma.hbm_to_vmem [thread:$0]  %s222, 2048, %s224, %s210, 512, 128, 8
        $region24: #{tpu_custom_call.1} parent=15 // pred_fallthru
          _
        // Predicated region
        $region25: #{tpu_custom_call.1} parent=15 // pred_check
          %p230 = pneg %p116
        $region26: #{tpu_custom_call.1} parent=15 // pred_check_branch
          %232 = sbr.rel (%p230) target = $region28
        $region27: #{tpu_custom_call.1} parent=15 // pred_region
          %s233 = smul.u32 2, %s29
          %p234 = scmp.lt.s32.totalorder %s233, 7
          %s235 = scalar_select %p234, %s233, 7
          %s236 = scalar_lea.vmem %s3, %s235
          %s237 = smul.u32 2, %s29
        $region28: #{tpu_custom_call.1} parent=15 // pred_fallthru
          _
        // Predicated region
        $region29: #{tpu_custom_call.1} parent=15 // pred_check
          %p238 = pneg %p142
        $region30: #{tpu_custom_call.1} parent=15 // pred_check_branch
          %240 = sbr.rel (%p238) target = $region32
        $region31: #{tpu_custom_call.1} parent=15 // pred_region
          %p241 = scmp.lt.s32.totalorder %s28, 1
          %s242 = scalar_select %p241, %s28, 1
          %s243 = smul.addr %s242, 8
          %s244 = scalar_lea.vmem %s4, %s243
        $region32: #{tpu_custom_call.1} parent=15 // pred_fallthru
          _
      $region16: #{tpu_custom_call.1} parent=5 // pred_fallthru
        _
      %p245 = scmp.le.s32.totalorder 1, %s21
      %p246 = scmp.lt.s32.totalorder %s21, 17
      %p247 = pnand %p245, %p246
      %p248 = pneg %p247
      // Predicated region
      $region33: #{tpu_custom_call.1} parent=5 // pred_check
        _
      $region34: #{tpu_custom_call.1} parent=5 // pred_check_branch
        %250 = sbr.rel (%p247) target = $region36
      $region35: #{tpu_custom_call.1} parent=5 // pred_region
        %s251 = ssub.s32 %s21, 1
        %s252 = sand.u32 %s83, 1
        %s253 = scalar_lea.sflag [#allocation6], %s252
        %s254 = sand.u32 %s83, 1
        %s255 = smul.addr %s254, 128
        %s256 = scalar_lea.vmem [#allocation5], %s255
        // Predicated region
        $region37: #{tpu_custom_call.1} parent=35 // pred_check
          %p257 = pneg %p96
        $region38: #{tpu_custom_call.1} parent=35 // pred_check_branch
          %259 = sbr.rel (%p257) target = $region40
        $region39: #{tpu_custom_call.1} parent=35 // pred_region
          %260 = dma.done %s253, 2048
        $region40: #{tpu_custom_call.1} parent=35 // pred_fallthru
          _
        %p261 = scmp.lt.s32.totalorder %s31, 1
        %s262 = scalar_select %p261, %s31, 1
        %p263 = scmp.lt.s32.totalorder %s33, 1
        %s264 = scalar_select %p263, %s33, 1
        %s265 = smul.addr %s262, 2
        %s266 = sadd.s32 %s264, %s265
        %s267 = smul.addr %s266, 4
        %s268 = scalar_lea.vmem %s1, %s267
        %p269 = pneg %p68
        %p270 = pneg %p65
        %s271 = sand.u32 %s83, 1
        %s272 = scalar_lea.sflag [#allocation6], %s271
        %s273 = sand.u32 %s83, 1
        %s274 = smul.addr %s273, 128
        %s275 = scalar_lea.vmem [#allocation5], %s274
        %p276 = pneg %p96
        %p277 = pneg %p93
        %s278 = smul.u32 2, %s32
        %p279 = scmp.lt.s32.totalorder %s278, 7
        %s280 = scalar_select %p279, %s278, 7
        %s281 = scalar_lea.vmem %s3, %s280
        %p282 = pneg %p122
        %p283 = pneg %p119
        %p284 = scmp.lt.s32.totalorder %s31, 1
        %s285 = scalar_select %p284, %s31, 1
        %s286 = smul.addr %s285, 8
        %s287 = scalar_lea.vmem %s4, %s286
        %p288 = pneg %p148
        %p289 = pneg %p145
        %p290 = pneg %p176
        %p291 = pneg %p173
        %s292 = sand.u32 %s163, 1
        %s293 = scalar_lea.sflag [#allocation7], %s292
        %s294 = sand.u32 %s163, 1
        %s295 = smul.addr %s294, 16
        %s296 = scalar_lea.vmem [#allocation8], %s295
        %p297 = scmp.lt.s32.totalorder %s31, 1
        %s298 = scalar_select %p297, %s31, 1
        %p299 = scmp.lt.s32.totalorder %s33, 1
        %s300 = scalar_select %p299, %s33, 1
        %s301 = smul.addr %s298, 2
        %s302 = sadd.s32 %s300, %s301
        %s303 = smul.addr %s302, 4
        %s304 = scalar_lea.vmem %s1, %s303
        %s305 = smul.u32 16, %s33
        %s306 = smul.u32 2, %s32
        %s307 = smul.u32 2, %s32
        %p308 = scmp.lt.s32.totalorder %s307, 7
        %s309 = scalar_select %p308, %s307, 7
        %s310 = scalar_lea.vmem %s3, %s309
        %s311 = smul.u32 2, %s32
        %p312 = scmp.lt.s32.totalorder %s31, 1
        %s313 = scalar_select %p312, %s31, 1
        %s314 = smul.addr %s313, 8
        %s315 = scalar_lea.vmem %s4, %s314
        %s316 = smul.u32 2, %s32
        %p318 = scmp.eq.s32.totalorder %s33, 0
        // Predicated region
        $region41: #{tpu_custom_call.1} parent=35 // pred_check
          %p319 = pneg %p318
        $region42: #{tpu_custom_call.1} parent=35 // pred_check_branch
          %321 = sbr.rel (%p319) target = $region44
        $region43: #{tpu_custom_call.1} parent=35 // pred_region
          %v322 = vld [vmem:[%s310] sm:$0x3]
          %v324 = vlaneseq
          %v325 = vshrl.u32 %v324, 7
          %v326 = vsub.s32 0, %v325
          %v327 = vrot.slane %v322, %v326
          %v328 = vlaneseq
          %v329 = vshrl.u32 %v328, 7
          %v330 = vsub.s32 1, %v329
          %v331 = vrot.slane %v322, %v330
          %334 = vst [vmem:[#allocation2] sm:$0xff] %v327
          %335 = vst [vmem:[#allocation2 + $0x8] sm:$0xff] %v331
        $region44: #{tpu_custom_call.1} parent=35 // pred_fallthru
          _
        %v336 = vld [vmem:[#allocation2] sm:$0xff]
        %v337 = vld [vmem:[#allocation2 + $0x8] sm:$0xff]
        %v338 = vld [vmem:[%s304] sm:$0xf]
        %v339 = vld [vmem:[%s256] sm:$0xff]
        %v340 = vld [vmem:[%s256 + $0x8] sm:$0xff]
        %v341 = vld [vmem:[%s256 + $0x10] sm:$0xff]
        %v342 = vld [vmem:[%s256 + $0x18] sm:$0xff]
        %v343 = vld [vmem:[%s256 + $0x20] sm:$0xff]
        %v344 = vld [vmem:[%s256 + $0x28] sm:$0xff]
        %v345 = vld [vmem:[%s256 + $0x30] sm:$0xff]
        %v346 = vld [vmem:[%s256 + $0x38] sm:$0xff]
        %v347 = vld [vmem:[%s256 + $0x40] sm:$0xff]
        %v348 = vld [vmem:[%s256 + $0x48] sm:$0xff]
        %v349 = vld [vmem:[%s256 + $0x50] sm:$0xff]
        %v350 = vld [vmem:[%s256 + $0x58] sm:$0xff]
        %v351 = vld [vmem:[%s256 + $0x60] sm:$0xff]
        %v352 = vld [vmem:[%s256 + $0x68] sm:$0xff]
        %v353 = vld [vmem:[%s256 + $0x70] sm:$0xff]
        %v354 = vld [vmem:[%s256 + $0x78] sm:$0xff]
        %v371 = vunpack.c.l.b16 %v339
        %v372 = vunpack.c.h.b16 %v339
        %v373 = vunpack.c.l.b16 %v340
        %v374 = vunpack.c.h.b16 %v340
        %v375 = vunpack.c.l.b16 %v341
        %v376 = vunpack.c.h.b16 %v341
        %v377 = vunpack.c.l.b16 %v342
        %v378 = vunpack.c.h.b16 %v342
        %v379 = vunpack.c.l.b16 %v343
        %v380 = vunpack.c.h.b16 %v343
        %v381 = vunpack.c.l.b16 %v344
        %v382 = vunpack.c.h.b16 %v344
        %v383 = vunpack.c.l.b16 %v345
        %v384 = vunpack.c.h.b16 %v345
        %v385 = vunpack.c.l.b16 %v346
        %v386 = vunpack.c.h.b16 %v346
        %v387 = vunpack.c.l.b16 %v347
        %v388 = vunpack.c.h.b16 %v347
        %v389 = vunpack.c.l.b16 %v348
        %v390 = vunpack.c.h.b16 %v348
        %v391 = vunpack.c.l.b16 %v349
        %v392 = vunpack.c.h.b16 %v349
        %v393 = vunpack.c.l.b16 %v350
        %v394 = vunpack.c.h.b16 %v350
        %v395 = vunpack.c.l.b16 %v351
        %v396 = vunpack.c.h.b16 %v351
        %v397 = vunpack.c.l.b16 %v352
        %v398 = vunpack.c.h.b16 %v352
        %v399 = vunpack.c.l.b16 %v353
        %v400 = vunpack.c.h.b16 %v353
        %v401 = vunpack.c.l.b16 %v354
        %v402 = vunpack.c.h.b16 %v354
        %v403 = vpack.c.b16 %v373, %v371
        %v404 = vpack.c.b16 %v374, %v372
        %v405 = vpack.c.b16 %v377, %v375
        %v406 = vpack.c.b16 %v378, %v376
        %v407 = vpack.c.b16 %v381, %v379
        %v408 = vpack.c.b16 %v382, %v380
        %v409 = vpack.c.b16 %v385, %v383
        %v410 = vpack.c.b16 %v386, %v384
        %v411 = vpack.c.b16 %v389, %v387
        %v412 = vpack.c.b16 %v390, %v388
        %v413 = vpack.c.b16 %v393, %v391
        %v414 = vpack.c.b16 %v394, %v392
        %v415 = vpack.c.b16 %v397, %v395
        %v416 = vpack.c.b16 %v398, %v396
        %v417 = vpack.c.b16 %v401, %v399
        %v418 = vpack.c.b16 %v402, %v400
        %435 = vmatprep.subr.bf16.mxu0 %v404
        %436 = vmatpush1.bf16.msra.mxu0 %v403
        %437 = vmatprep.subr.bf16.mxu0 %v406
        %438 = vmatpush1.bf16.msra.mxu0 %v405
        %439 = vmatprep.subr.bf16.mxu0 %v408
        %440 = vmatpush1.bf16.msra.mxu0 %v407
        %441 = vmatprep.subr.bf16.mxu0 %v410
        %442 = vmatpush1.bf16.msra.mxu0 %v409
        %443 = vmatprep.subr.bf16.mxu0 %v412
        %444 = vmatpush1.bf16.msra.mxu0 %v411
        %445 = vmatprep.subr.bf16.mxu0 %v414
        %446 = vmatpush1.bf16.msra.mxu0 %v413
        %447 = vmatprep.subr.bf16.mxu0 %v416
        %448 = vmatpush1.bf16.msra.mxu0 %v415
        %449 = vmatprep.subr.bf16.mxu0 %v418
        %450 = vmatpush1.bf16.msra.mxu0 %v417
        %451 = vmatprep.subr.bf16.mxu0 0
        %452 = vmatpush1.bf16.msra.mxu0 0
        %453 = vmatprep.subr.bf16.mxu0 0
        %454 = vmatpush1.bf16.msra.mxu0 0
        %455 = vmatprep.subr.bf16.mxu0 0
        %456 = vmatpush1.bf16.msra.mxu0 0
        %457 = vmatprep.subr.bf16.mxu0 0
        %458 = vmatpush1.bf16.msra.mxu0 0
        %459 = vmatprep.subr.bf16.mxu0 0
        %460 = vmatpush1.bf16.msra.mxu0 0
        %461 = vmatprep.subr.bf16.mxu0 0
        %462 = vmatpush1.bf16.msra.mxu0 0
        %463 = vmatprep.subr.bf16.mxu0 0
        %464 = vmatpush1.bf16.msra.mxu0 0
        %465 = vmatprep.subr.bf16.mxu0 0
        %466 = vmatpush1.bf16.msra.mxu0 0
        %467 = vmatprep.mubr.bf16.mxu0 0
        %468 = vmatmul.mubr.bf16.gmra.mrb[0].mxu0 %v338
        %v469 = vpop.f32.mrb[0].mxu0
        %v470 = vadd.f32 0.0, %v469
        %v471 = vpop.f32.mrb[0].mxu0
        %v472 = vadd.f32 0.0, %v471
        %v473 = vpop.f32.mrb[0].mxu0
        %v474 = vpop.f32.mrb[0].mxu0
        %475 = vdwg.mxu0
        %v476 = vadd.f32 %v336, %v470
        %v477 = vadd.f32 %v337, %v472
        %478 = vst [vmem:[#allocation2] sm:$0xff] %v476
        %479 = vst [vmem:[#allocation2 + $0x8] sm:$0xff] %v477
        %p480 = scmp.eq.s32.totalorder %s33, 1
        // Predicated region
        $region45: #{tpu_custom_call.1} parent=35 // pred_check
          %p481 = pneg %p480
        $region46: #{tpu_custom_call.1} parent=35 // pred_check_branch
          %483 = sbr.rel (%p481) target = $region48
        $region47: #{tpu_custom_call.1} parent=35 // pred_region
          %v484 = vld [vmem:[#allocation2] sm:$0xff]
          %v485 = vld [vmem:[#allocation2 + $0x8] sm:$0xff]
          %s486 = smul.u32 %s31, 4
          %s487 = sadd.s32 %s486, %s32
          %s488 = sld [smem:[#allocation4 + %s487]]
          %p489 = scmp.ne.s32.totalorder %s488, 0
          // Predicated region
          $region49: #{tpu_custom_call.1} parent=47 // pred_check
            %p490 = pneg %p489
          $region50: #{tpu_custom_call.1} parent=47 // pred_check_branch
            %492 = sbr.rel (%p490) target = $region52
          $region51: #{tpu_custom_call.1} parent=47 // pred_region
            %v493 = vmul.f32 %v484, %v484
            %v494 = vmul.f32 %v485, %v485
            %v495 = vsub.f32 1.0, %v493
            %v496 = vsub.f32 1.0, %v494
            %v497 = vmax.f32 %v495, 1e-07
            %v498 = vmax.f32 %v496, 1e-07
            %v499 = vmin.f32 %v497, 1.0
            %v500 = vmin.f32 %v498, 1.0
            %v501 = vrsqrt.pop %v499
            %v502 = vmul.f32 %v499, %v501
            %vm503 = vcmp.eq.f32.partialorder %v499, inf
            %v504 = vsel %vm503, %v499, %v502
            %vm505 = vcmp.eq.f32.partialorder %v499, 0.0
            %v506 = vand.u32 %v499, 2147483648
            %v507 = vsel %vm505, %v506, %v504
            %v508 = vrsqrt.pop %v500
            %v509 = vmul.f32 %v500, %v508
            %vm510 = vcmp.eq.f32.partialorder %v500, inf
            %v511 = vsel %vm510, %v500, %v509
            %vm512 = vcmp.eq.f32.partialorder %v500, 0.0
            %v513 = vand.u32 %v500, 2147483648
            %v514 = vsel %vm512, %v513, %v511
            %v515 = vmul.f32 %v484, 0.9950042
            %v516 = vmul.f32 %v485, 0.9950042
            %v517 = vmul.f32 %v507, 0.099833414
            %v518 = vmul.f32 %v514, 0.099833414
            %v519 = vsub.f32 %v515, %v517
            %v520 = vsub.f32 %v516, %v518
            %vm521 = vcmp.gt.f32.partialorder %v484, -0.9950042
            %vm522 = vcmp.gt.f32.partialorder %v485, -0.9950042
            %v523 = vsub.f32 %v484, 0.009983341
            %v524 = vsub.f32 %v485, 0.009983341
            %v525 = vsel %vm521, %v519, %v523
            %v526 = vsel %vm522, %v520, %v524
            %v527 = vlaneseq
            %v528 = vand.u32 %v527, 127
            %v529 = vadd.s32 %v528, 128
            %s530 = smul.u32 %s32, 256
            %v531 = vstv %s530
            %v532 = vadd.s32 %v528, %v531
            %v533 = vadd.s32 %v529, %v531
            %v534 = vld [vmem:[%s315] sm:$0xff]
            %535 = vset.pattern.permute.xlu0 0
            %536 = vperm.xlu0 %535, %v534
            %v537 = vpop.permute.xlu0 %536
            %vm538 = vcmp.eq.s32.totalorder %v532, %v537
            %vm539 = vcmp.eq.s32.totalorder %v533, %v537
            %v540 = vsel %vm538, %v525, %v484
            %v541 = vsel %vm539, %v526, %v485
            %v542 = vmul.f32 %v540, 30.0
            %v543 = vmul.f32 %v541, 30.0
            %544 = vst [vmem:[%s296] sm:$0xff] %v542
            %545 = vst [vmem:[%s296 + $0x8] sm:$0xff] %v543
          $region52: #{tpu_custom_call.1} parent=47 // pred_fallthru
            _
          %p546 = scmp.eq.s32.totalorder %s488, 0
          // Predicated region
          $region53: #{tpu_custom_call.1} parent=47 // pred_check
            %p547 = pneg %p546
          $region54: #{tpu_custom_call.1} parent=47 // pred_check_branch
            %549 = sbr.rel (%p547) target = $region56
          $region55: #{tpu_custom_call.1} parent=47 // pred_region
            %v550 = vmul.f32 %v484, 30.0
            %v551 = vmul.f32 %v485, 30.0
            %552 = vst [vmem:[%s296] sm:$0xff] %v550
            %553 = vst [vmem:[%s296 + $0x8] sm:$0xff] %v551
          $region56: #{tpu_custom_call.1} parent=47 // pred_fallthru
            _
        $region48: #{tpu_custom_call.1} parent=35 // pred_fallthru
          _
        %s554 = sand.u32 %s163, 1
        %s555 = scalar_lea.sflag [#allocation7], %s554
        %s556 = sand.u32 %s163, 1
        %s557 = smul.addr %s556, 16
        %s558 = scalar_lea.vmem [#allocation8], %s557
        // Predicated region
        $region57: #{tpu_custom_call.1} parent=35 // pred_check
          %p559 = pneg %p173
        $region58: #{tpu_custom_call.1} parent=35 // pred_check_branch
          %561 = sbr.rel (%p559) target = $region60
        $region59: #{tpu_custom_call.1} parent=35 // pred_region
          %s562 = smul.u32 2, %s32
          %s564 = ssub.s32 256, 256
          %565 = vsyncadd %s555, %s564
          %s566 = smul.addr %s31, 8
          %s567 = sadd.s32 %s562, %s566
          %s568 = smul.addr %s567, 128
          %s569 = scalar_lea.hbm %s5, %s568
          %s571 = sshll.u32 %s558, 4
          %s572 = int_to_ptr.vmem [resolvable:$true] %s571
          %574 = dma.vmem_to_hbm [thread:$0]  %s572, 256, %s569, %s555
        $region60: #{tpu_custom_call.1} parent=35 // pred_fallthru
          _
      $region36: #{tpu_custom_call.1} parent=5 // pred_fallthru
        _
      %p575 = scmp.le.s32.totalorder 2, %s21
      // Predicated region
      $region61: #{tpu_custom_call.1} parent=5 // pred_check
        %p576 = pneg %p575
      $region62: #{tpu_custom_call.1} parent=5 // pred_check_branch
        %578 = sbr.rel (%p576) target = $region64
      $region63: #{tpu_custom_call.1} parent=5 // pred_region
        %s579 = ssub.s32 %s21, 2
        // Predicated region
        $region65: #{tpu_custom_call.1} parent=63 // pred_check
          %p580 = pneg %p179
        $region66: #{tpu_custom_call.1} parent=63 // pred_check_branch
          %582 = sbr.rel (%p580) target = $region68
        $region67: #{tpu_custom_call.1} parent=63 // pred_region
          %s583 = sand.u32 %s164, 1
          %s584 = scalar_lea.sflag [#allocation7], %s583
          %s585 = sand.u32 %s164, 1
          %s586 = smul.addr %s585, 16
          %s587 = scalar_lea.vmem [#allocation8], %s586
          %588 = dma.done %s584, 256
        $region68: #{tpu_custom_call.1} parent=63 // pred_fallthru
          _
      $region64: #{tpu_custom_call.1} parent=5 // pred_fallthru
        _
    $region6: #{tpu_custom_call.1} parent=1 // loop_footer
      %s25 = sadd.s32 1, %s21
    $region7: #{tpu_custom_call.1} parent=1 // loop_footer_branch
      %20 = sbr.rel target = $region3
    $region8: #{tpu_custom_call.1} parent=1 // loop_exit
      _
    %589 = vsyncpa [#allocation6], 1
    %s590 = scalar_lea.sflag [#allocation6], 1
    %591 = vsyncpa %s590, 1
    %592 = vsyncpa [#allocation7], 1
    %s593 = scalar_lea.sflag [#allocation7], 1
    %594 = vsyncpa %s593, 1

</llo_original>
